<compile_context>
chip_gen: v5e
topology: v5e:2x2
jax: 0.10.0
libtpu: 0.0.40
codegen_flags: <defaults>
</compile_context>

<pallas_src>
import math
import functools

import jax
import jax.numpy as jnp
from jax.experimental import pallas as pl
from jax.experimental.pallas import tpu as pltpu


def _gelu_tanh(x):
    c = math.sqrt(2.0 / math.pi)
    return 0.5 * x * (1.0 + jnp.tanh(c * (x + 0.044715 * x * x * x)))


def _layer_norm(h, gamma, beta, eps=1e-5):
    mean = jnp.mean(h, axis=-1, keepdims=True)
    var = jnp.mean((h - mean) * (h - mean), axis=-1, keepdims=True)
    return (h - mean) * jax.lax.rsqrt(var + eps) * gamma + beta


def mlp_policy_kernel(x_ref, w_in_ref, w_mid_ref, w_out_ref, vec_ref, o_ref,
                      *, use_softmax):
    H = w_in_ref.shape[1]
    A_pad = w_out_ref.shape[1]
    L = w_mid_ref.shape[0] // 2

    def vrow(r, width):
        # static slice of the bias/LN vector slab -> shape (1, width)
        return vec_ref[r:r + 1, :width]

    x = x_ref[...]                                       # (tb, in_dim) f32

    # Input layer: Linear -> GELU -> Dropout(identity, eval semantics).
    h = jnp.dot(x, w_in_ref[...], preferred_element_type=jnp.float32)
    h = _gelu_tanh(h + vrow(0, H))

    # Residual blocks (unrolled; L is small).
    # TODO(synk): for large L switch to lax.fori_loop with dynamic stack
    # indexing to keep vreg live ranges bounded.
    for l in range(L):
        b1 = vrow(1 + l, H)
        b2 = vrow(1 + L + l, H)
        gamma = vrow(1 + 2 * L + l, H)
        beta = vrow(1 + 3 * L + l, H)

        t = jnp.dot(h, w_mid_ref[l], preferred_element_type=jnp.float32) + b1
        t = _gelu_tanh(t)
        t = jnp.dot(t, w_mid_ref[L + l], preferred_element_type=jnp.float32) + b2
        # Dropout(identity in eval), then LayerNorm on the branch (pre-add):
        #   x + LayerNorm(Dropout(Linear(GELU(Linear(x)))))
        t = _layer_norm(t, gamma, beta)
        h = h + t

    # Output layer: padded actions carry a -1e30 bias so they vanish under the
    # softmax and get sliced off in the wrapper.
    b_out = vrow(4 * L + 1, A_pad)
    logits = jnp.dot(h, w_out_ref[...], preferred_element_type=jnp.float32) + b_out

    if use_softmax:
        m = jnp.max(logits, axis=-1, keepdims=True)
        e = jnp.exp(logits - m)
        # exact reciprocal: output probabilities must sum to 1 within 1e-5
        logits = e * pl.reciprocal(jnp.sum(e, axis=-1, keepdims=True),
                                   approx=False)

    o_ref[...] = logits


def _pick_batch_tile(B):
    """Small B: single grid step (fixed overhead dominates).  B >= 64: at
    least two steps (multiple of 8, capped at 1024) so the 'parallel' batch
    axis can be split across v7x's two TensorCores."""
    if B < 64:
        return B
    half = -(-B // 2)                                    # ceil(B / 2)
    return min(1024, ((half + 7) // 8) * 8)


def mlp_policy_forward(x, params, *, num_layers, use_softmax, tb=None):
    """x: (B, field_size, field_size) float32 -> (B, num_actions) float32."""
    B = x.shape[0]
    x2d = x.reshape(B, -1)                               # nn.Flatten(start_dim=1)
    in_dim = x2d.shape[1]

    (w_in, b_in, w1s, b1s, w2s, b2s, gs, bes, w_out, b_out) = params
    H = w_in.shape[1]
    A = w_out.shape[1]
    L = num_layers

    # Lane-dense output slab: pad the action dim up to a multiple of 128.
    A_pad = ((A + 127) // 128) * 128
    w_out_p = jnp.zeros((H, A_pad), jnp.float32).at[:, :A].set(w_out)

    # One weight stack for both per-layer linears: rows [0,L) = fc1, [L,2L) = fc2.
    w_mid = jnp.concatenate([w1s, w2s], axis=0)          # (2L, H, H)

    # One f32 vec slab for every bias / LayerNorm vector (cuts ref count).
    W = max(H, A_pad)
    R = 4 * L + 2
    vec = jnp.zeros((R, W), jnp.float32)
    vec = vec.at[0, :H].set(b_in[0])
    vec = vec.at[1:1 + L, :H].set(b1s[:, 0, :])
    vec = vec.at[1 + L:1 + 2 * L, :H].set(b2s[:, 0, :])
    vec = vec.at[1 + 2 * L:1 + 3 * L, :H].set(gs[:, 0, :])
    vec = vec.at[1 + 3 * L:1 + 4 * L, :H].set(bes[:, 0, :])
    vec = vec.at[4 * L + 1, :].set(-1e30)                # padded-action logit bias
    vec = vec.at[4 * L + 1, :A].set(b_out[0])

    # Batch tiling: zero-pad to a whole number of tiles, slice back afterwards.
    if tb is None:
        tb = _pick_batch_tile(B)
    num_tiles = pl.cdiv(B, tb)
    B_pad = num_tiles * tb
    if B_pad != B:
        x2d = jnp.pad(x2d, ((0, B_pad - B), (0, 0)))

    # Explicit VMEM budget so the tile plan is predictable on v5e/v6e/v7x.
    vmem_need = 4 * (2 * tb * (in_dim + A_pad)
                     + 2 * (in_dim * H + 2 * L * H * H + H * A_pad + R * W))
    vmem_limit = int(min(max(2 * vmem_need, 16 << 20), 48 << 20))

    kernel = functools.partial(mlp_policy_kernel, use_softmax=use_softmax)

    def _const_spec(shape):
        zeros = (0,) * len(shape)
        return pl.BlockSpec(shape, lambda i: zeros)

    out_padded = pl.pallas_call(
        kernel,
        out_shape=jax.ShapeDtypeStruct((B_pad, A_pad), jnp.float32),
        grid=(num_tiles,),
        in_specs=[
            pl.BlockSpec((tb, in_dim), lambda i: (i, 0)),   # x tile
            _const_spec((in_dim, H)),                       # w_in
            _const_spec((2 * L, H, H)),                     # fc1 | fc2 stack
            _const_spec((H, A_pad)),                        # w_out (lane-padded)
            _const_spec((R, W)),                            # bias / LN vec slab
        ],
        out_specs=pl.BlockSpec((tb, A_pad), lambda i: (i, 0)),
        compiler_params=pltpu.CompilerParams(
            dimension_semantics=("parallel",),
            vmem_limit_bytes=vmem_limit),
    )(x2d, w_in, w_mid, w_out_p, vec)

    return out_padded[:B, :A]


def init_params(key, *, in_dim, hidden, num_actions, num_layers):
    """Deterministic init mirroring PyTorch nn.Linear / nn.LayerNorm defaults."""
    def linear(k, fan_in, fan_out):
        k1, k2 = jax.random.split(k)
        bound = 1.0 / math.sqrt(fan_in)
        w = jax.random.uniform(k1, (fan_in, fan_out), jnp.float32, -bound, bound)
        b = jax.random.uniform(k2, (1, fan_out), jnp.float32, -bound, bound)
        return w, b

    keys = jax.random.split(key, 2 + 2 * num_layers)
    w_in, b_in = linear(keys[0], in_dim, hidden)

    w1s, b1s, w2s, b2s, gs, bes = [], [], [], [], [], []
    for l in range(num_layers):
        w1, b1 = linear(keys[1 + 2 * l], hidden, hidden)
        w2, b2 = linear(keys[2 + 2 * l], hidden, hidden)
        w1s.append(w1); b1s.append(b1); w2s.append(w2); b2s.append(b2)
        gs.append(jnp.ones((1, hidden), jnp.float32))     # LayerNorm weight
        bes.append(jnp.zeros((1, hidden), jnp.float32))   # LayerNorm bias

    w_out, b_out = linear(keys[-1], hidden, num_actions)

    stack = lambda xs: jnp.stack(xs, axis=0)
    return (w_in, b_in,
            stack(w1s), stack(b1s), stack(w2s), stack(b2s),
            stack(gs), stack(bes),
            w_out, b_out)


if __name__ == "__main__":
    # hyperparameters ("args"): field_size=4, num_hidden_units=32,
    # num_layers=2, dropout_probability=0.1 (identity in eval),
    # algorithm='policy_gradient' -> softmax output.
    field_size = 4
    hidden = 32
    num_layers = 2
    batch = 16
    in_dim = field_size ** 2
    num_actions = field_size ** 2

    key = jax.random.PRNGKey(0)
    kx, kp = jax.random.split(key)

    x = jax.random.normal(kx, (batch, field_size, field_size), jnp.float32)
    params = init_params(kp, in_dim=in_dim, hidden=hidden,
                         num_actions=num_actions, num_layers=num_layers)

    out = mlp_policy_forward(x, params, num_layers=num_layers,
                             use_softmax=True)
    out = jax.block_until_ready(out)

    assert out.shape == (batch, num_actions)
    # policy outputs are a probability distribution over actions
    assert bool(jnp.all(jnp.isfinite(out)))
    assert bool(jnp.allclose(jnp.sum(out, axis=-1), 1.0, atol=1e-5))
    print("KERNEL_OK")
</pallas_src>

<mosaic_0001>
module attributes {stable_mosaic.version = 11 : i64} {
  func.func @mlp_policy_kernel(%arg0: i32, %arg1: memref<16x16xf32, #tpu.memory_space<vmem>>, %arg2: memref<16x32xf32, #tpu.memory_space<vmem>>, %arg3: memref<4x32x32xf32, #tpu.memory_space<vmem>>, %arg4: memref<32x128xf32, #tpu.memory_space<vmem>>, %arg5: memref<10x128xf32, #tpu.memory_space<vmem>>, %arg6: memref<16x128xf32, #tpu.memory_space<vmem>>) attributes {dimension_semantics = [#tpu.dimension_semantics<parallel>], iteration_bounds = array<i64: 1>, scalar_prefetch = 0 : i64, scratch_operands = 0 : i64, tpu.core_type = #tpu.core_type<tc>, window_params = [{transform_indices = @transform_0, window_bounds = array<i64: 16, 16>}, {pipeline_mode = #tpu.pipeline_mode<synchronous>, transform_indices = @transform_1, window_bounds = array<i64: 16, 32>}, {pipeline_mode = #tpu.pipeline_mode<synchronous>, transform_indices = @transform_2, window_bounds = array<i64: 4, 32, 32>}, {pipeline_mode = #tpu.pipeline_mode<synchronous>, transform_indices = @transform_3, window_bounds = array<i64: 32, 128>}, {pipeline_mode = #tpu.pipeline_mode<synchronous>, transform_indices = @transform_4, window_bounds = array<i64: 10, 128>}, {transform_indices = @transform_5, window_bounds = array<i64: 16, 128>}]} {
    %c0 = arith.constant 0 : index
    %c0_0 = arith.constant 0 : index
    %0 = vector.load %arg1[%c0, %c0_0] : memref<16x16xf32, #tpu.memory_space<vmem>>, vector<16x16xf32>
    %c0_1 = arith.constant 0 : index
    %c0_2 = arith.constant 0 : index
    %1 = vector.load %arg2[%c0_1, %c0_2] : memref<16x32xf32, #tpu.memory_space<vmem>>, vector<16x32xf32>
    %cst = arith.constant dense<0.000000e+00> : vector<16x32xf32>
    %2 = tpu.matmul %0, %1, %cst {dimension_numbers = #tpu.dot_dimension_numbers<[1], [0], [0], [1], [0, 0, 1, 1], [], []>} : vector<16x16xf32>, vector<16x32xf32>, vector<16x32xf32> -> vector<16x32xf32>
    %c0_3 = arith.constant 0 : index
    %c0_4 = arith.constant 0 : index
    %3 = vector.load %arg5[%c0_3, %c0_4] : memref<10x128xf32, #tpu.memory_space<vmem>>, vector<1x32xf32>
    %4 = vector.broadcast %3 : vector<1x32xf32> to vector<16x32xf32>
    %5 = arith.addf %2, %4 : vector<16x32xf32>
    %cst_5 = arith.constant 5.000000e-01 : f32
    %6 = vector.broadcast %cst_5 : f32 to vector<16x32xf32>
    %7 = arith.mulf %6, %5 : vector<16x32xf32>
    %cst_6 = arith.constant 4.471500e-02 : f32
    %8 = vector.broadcast %cst_6 : f32 to vector<16x32xf32>
    %9 = arith.mulf %8, %5 : vector<16x32xf32>
    %10 = arith.mulf %9, %5 : vector<16x32xf32>
    %11 = arith.mulf %10, %5 : vector<16x32xf32>
    %12 = arith.addf %5, %11 : vector<16x32xf32>
    %cst_7 = arith.constant 0.797884583 : f32
    %13 = vector.broadcast %cst_7 : f32 to vector<16x32xf32>
    %14 = arith.mulf %13, %12 : vector<16x32xf32>
    %15 = math.tanh %14 : vector<16x32xf32>
    %cst_8 = arith.constant 1.000000e+00 : f32
    %16 = vector.broadcast %cst_8 : f32 to vector<16x32xf32>
    %17 = arith.addf %16, %15 : vector<16x32xf32>
    %18 = arith.mulf %7, %17 : vector<16x32xf32>
    %c1 = arith.constant 1 : index
    %c0_9 = arith.constant 0 : index
    %19 = vector.load %arg5[%c1, %c0_9] : memref<10x128xf32, #tpu.memory_space<vmem>>, vector<1x32xf32>
    %c3 = arith.constant 3 : index
    %c0_10 = arith.constant 0 : index
    %20 = vector.load %arg5[%c3, %c0_10] : memref<10x128xf32, #tpu.memory_space<vmem>>, vector<1x32xf32>
    %c5 = arith.constant 5 : index
    %c0_11 = arith.constant 0 : index
    %21 = vector.load %arg5[%c5, %c0_11] : memref<10x128xf32, #tpu.memory_space<vmem>>, vector<1x32xf32>
    %c7 = arith.constant 7 : index
    %c0_12 = arith.constant 0 : index
    %22 = vector.load %arg5[%c7, %c0_12] : memref<10x128xf32, #tpu.memory_space<vmem>>, vector<1x32xf32>
    %c0_13 = arith.constant 0 : index
    %c0_14 = arith.constant 0 : index
    %c0_15 = arith.constant 0 : index
    %23 = vector.load %arg3[%c0_13, %c0_14, %c0_15] : memref<4x32x32xf32, #tpu.memory_space<vmem>>, vector<1x32x32xf32>
    %24 = vector.shape_cast %23 : vector<1x32x32xf32> to vector<32x32xf32>
    %cst_16 = arith.constant dense<0.000000e+00> : vector<16x32xf32>
    %25 = tpu.matmul %18, %24, %cst_16 {dimension_numbers = #tpu.dot_dimension_numbers<[1], [0], [0], [1], [0, 0, 1, 1], [], []>} : vector<16x32xf32>, vector<32x32xf32>, vector<16x32xf32> -> vector<16x32xf32>
    %26 = vector.broadcast %19 : vector<1x32xf32> to vector<16x32xf32>
    %27 = arith.addf %25, %26 : vector<16x32xf32>
    %cst_17 = arith.constant 5.000000e-01 : f32
    %28 = vector.broadcast %cst_17 : f32 to vector<16x32xf32>
    %29 = arith.mulf %28, %27 : vector<16x32xf32>
    %cst_18 = arith.constant 4.471500e-02 : f32
    %30 = vector.broadcast %cst_18 : f32 to vector<16x32xf32>
    %31 = arith.mulf %30, %27 : vector<16x32xf32>
    %32 = arith.mulf %31, %27 : vector<16x32xf32>
    %33 = arith.mulf %32, %27 : vector<16x32xf32>
    %34 = arith.addf %27, %33 : vector<16x32xf32>
    %cst_19 = arith.constant 0.797884583 : f32
    %35 = vector.broadcast %cst_19 : f32 to vector<16x32xf32>
    %36 = arith.mulf %35, %34 : vector<16x32xf32>
    %37 = math.tanh %36 : vector<16x32xf32>
    %cst_20 = arith.constant 1.000000e+00 : f32
    %38 = vector.broadcast %cst_20 : f32 to vector<16x32xf32>
    %39 = arith.addf %38, %37 : vector<16x32xf32>
    %40 = arith.mulf %29, %39 : vector<16x32xf32>
    %c2 = arith.constant 2 : index
    %c0_21 = arith.constant 0 : index
    %c0_22 = arith.constant 0 : index
    %41 = vector.load %arg3[%c2, %c0_21, %c0_22] : memref<4x32x32xf32, #tpu.memory_space<vmem>>, vector<1x32x32xf32>
    %42 = vector.shape_cast %41 : vector<1x32x32xf32> to vector<32x32xf32>
    %cst_23 = arith.constant dense<0.000000e+00> : vector<16x32xf32>
    %43 = tpu.matmul %40, %42, %cst_23 {dimension_numbers = #tpu.dot_dimension_numbers<[1], [0], [0], [1], [0, 0, 1, 1], [], []>} : vector<16x32xf32>, vector<32x32xf32>, vector<16x32xf32> -> vector<16x32xf32>
    %44 = vector.broadcast %20 : vector<1x32xf32> to vector<16x32xf32>
    %45 = arith.addf %43, %44 : vector<16x32xf32>
    %cst_24 = arith.constant dense<0.000000e+00> : vector<16xf32>
    %46 = vector.multi_reduction <add>, %45, %cst_24 [1] : vector<16x32xf32> to vector<16xf32>
    %47 = vector.shape_cast %46 : vector<16xf32> to vector<16x1xf32>
    %cst_25 = arith.constant 3.200000e+01 : f32
    %48 = vector.broadcast %cst_25 : f32 to vector<16x1xf32>
    %49 = arith.divf %47, %48 : vector<16x1xf32>
    %50 = vector.broadcast %49 : vector<16x1xf32> to vector<16x32xf32>
    %51 = arith.subf %45, %50 : vector<16x32xf32>
    %52 = vector.broadcast %49 : vector<16x1xf32> to vector<16x32xf32>
    %53 = arith.subf %45, %52 : vector<16x32xf32>
    %54 = arith.mulf %51, %53 : vector<16x32xf32>
    %cst_26 = arith.constant dense<0.000000e+00> : vector<16xf32>
    %55 = vector.multi_reduction <add>, %54, %cst_26 [1] : vector<16x32xf32> to vector<16xf32>
    %56 = vector.shape_cast %55 : vector<16xf32> to vector<16x1xf32>
    %cst_27 = arith.constant 3.200000e+01 : f32
    %57 = vector.broadcast %cst_27 : f32 to vector<16x1xf32>
    %58 = arith.divf %56, %57 : vector<16x1xf32>
    %59 = vector.broadcast %49 : vector<16x1xf32> to vector<16x32xf32>
    %60 = arith.subf %45, %59 : vector<16x32xf32>
    %cst_28 = arith.constant 9.99999974E-6 : f32
    %61 = vector.broadcast %cst_28 : f32 to vector<16x1xf32>
    %62 = arith.addf %58, %61 : vector<16x1xf32>
    %63 = math.rsqrt %62 : vector<16x1xf32>
    %64 = vector.broadcast %63 : vector<16x1xf32> to vector<16x32xf32>
    %65 = arith.mulf %60, %64 : vector<16x32xf32>
    %66 = vector.broadcast %21 : vector<1x32xf32> to vector<16x32xf32>
    %67 = arith.mulf %65, %66 : vector<16x32xf32>
    %68 = vector.broadcast %22 : vector<1x32xf32> to vector<16x32xf32>
    %69 = arith.addf %67, %68 : vector<16x32xf32>
    %70 = arith.addf %18, %69 : vector<16x32xf32>
    %c2_29 = arith.constant 2 : index
    %c0_30 = arith.constant 0 : index
    %71 = vector.load %arg5[%c2_29, %c0_30] : memref<10x128xf32, #tpu.memory_space<vmem>>, vector<1x32xf32>
    %c4 = arith.constant 4 : index
    %c0_31 = arith.constant 0 : index
    %72 = vector.load %arg5[%c4, %c0_31] : memref<10x128xf32, #tpu.memory_space<vmem>>, vector<1x32xf32>
    %c6 = arith.constant 6 : index
    %c0_32 = arith.constant 0 : index
    %73 = vector.load %arg5[%c6, %c0_32] : memref<10x128xf32, #tpu.memory_space<vmem>>, vector<1x32xf32>
    %c8 = arith.constant 8 : index
    %c0_33 = arith.constant 0 : index
    %74 = vector.load %arg5[%c8, %c0_33] : memref<10x128xf32, #tpu.memory_space<vmem>>, vector<1x32xf32>
    %c1_34 = arith.constant 1 : index
    %c0_35 = arith.constant 0 : index
    %c0_36 = arith.constant 0 : index
    %75 = vector.load %arg3[%c1_34, %c0_35, %c0_36] : memref<4x32x32xf32, #tpu.memory_space<vmem>>, vector<1x32x32xf32>
    %76 = vector.shape_cast %75 : vector<1x32x32xf32> to vector<32x32xf32>
    %cst_37 = arith.constant dense<0.000000e+00> : vector<16x32xf32>
    %77 = tpu.matmul %70, %76, %cst_37 {dimension_numbers = #tpu.dot_dimension_numbers<[1], [0], [0], [1], [0, 0, 1, 1], [], []>} : vector<16x32xf32>, vector<32x32xf32>, vector<16x32xf32> -> vector<16x32xf32>
    %78 = vector.broadcast %71 : vector<1x32xf32> to vector<16x32xf32>
    %79 = arith.addf %77, %78 : vector<16x32xf32>
    %cst_38 = arith.constant 5.000000e-01 : f32
    %80 = vector.broadcast %cst_38 : f32 to vector<16x32xf32>
    %81 = arith.mulf %80, %79 : vector<16x32xf32>
    %cst_39 = arith.constant 4.471500e-02 : f32
    %82 = vector.broadcast %cst_39 : f32 to vector<16x32xf32>
    %83 = arith.mulf %82, %79 : vector<16x32xf32>
    %84 = arith.mulf %83, %79 : vector<16x32xf32>
    %85 = arith.mulf %84, %79 : vector<16x32xf32>
    %86 = arith.addf %79, %85 : vector<16x32xf32>
    %cst_40 = arith.constant 0.797884583 : f32
    %87 = vector.broadcast %cst_40 : f32 to vector<16x32xf32>
    %88 = arith.mulf %87, %86 : vector<16x32xf32>
    %89 = math.tanh %88 : vector<16x32xf32>
    %cst_41 = arith.constant 1.000000e+00 : f32
    %90 = vector.broadcast %cst_41 : f32 to vector<16x32xf32>
    %91 = arith.addf %90, %89 : vector<16x32xf32>
    %92 = arith.mulf %81, %91 : vector<16x32xf32>
    %c3_42 = arith.constant 3 : index
    %c0_43 = arith.constant 0 : index
    %c0_44 = arith.constant 0 : index
    %93 = vector.load %arg3[%c3_42, %c0_43, %c0_44] : memref<4x32x32xf32, #tpu.memory_space<vmem>>, vector<1x32x32xf32>
    %94 = vector.shape_cast %93 : vector<1x32x32xf32> to vector<32x32xf32>
    %cst_45 = arith.constant dense<0.000000e+00> : vector<16x32xf32>
    %95 = tpu.matmul %92, %94, %cst_45 {dimension_numbers = #tpu.dot_dimension_numbers<[1], [0], [0], [1], [0, 0, 1, 1], [], []>} : vector<16x32xf32>, vector<32x32xf32>, vector<16x32xf32> -> vector<16x32xf32>
    %96 = vector.broadcast %72 : vector<1x32xf32> to vector<16x32xf32>
    %97 = arith.addf %95, %96 : vector<16x32xf32>
    %cst_46 = arith.constant dense<0.000000e+00> : vector<16xf32>
    %98 = vector.multi_reduction <add>, %97, %cst_46 [1] : vector<16x32xf32> to vector<16xf32>
    %99 = vector.shape_cast %98 : vector<16xf32> to vector<16x1xf32>
    %cst_47 = arith.constant 3.200000e+01 : f32
    %100 = vector.broadcast %cst_47 : f32 to vector<16x1xf32>
    %101 = arith.divf %99, %100 : vector<16x1xf32>
    %102 = vector.broadcast %101 : vector<16x1xf32> to vector<16x32xf32>
    %103 = arith.subf %97, %102 : vector<16x32xf32>
    %104 = vector.broadcast %101 : vector<16x1xf32> to vector<16x32xf32>
    %105 = arith.subf %97, %104 : vector<16x32xf32>
    %106 = arith.mulf %103, %105 : vector<16x32xf32>
    %cst_48 = arith.constant dense<0.000000e+00> : vector<16xf32>
    %107 = vector.multi_reduction <add>, %106, %cst_48 [1] : vector<16x32xf32> to vector<16xf32>
    %108 = vector.shape_cast %107 : vector<16xf32> to vector<16x1xf32>
    %cst_49 = arith.constant 3.200000e+01 : f32
    %109 = vector.broadcast %cst_49 : f32 to vector<16x1xf32>
    %110 = arith.divf %108, %109 : vector<16x1xf32>
    %111 = vector.broadcast %101 : vector<16x1xf32> to vector<16x32xf32>
    %112 = arith.subf %97, %111 : vector<16x32xf32>
    %cst_50 = arith.constant 9.99999974E-6 : f32
    %113 = vector.broadcast %cst_50 : f32 to vector<16x1xf32>
    %114 = arith.addf %110, %113 : vector<16x1xf32>
    %115 = math.rsqrt %114 : vector<16x1xf32>
    %116 = vector.broadcast %115 : vector<16x1xf32> to vector<16x32xf32>
    %117 = arith.mulf %112, %116 : vector<16x32xf32>
    %118 = vector.broadcast %73 : vector<1x32xf32> to vector<16x32xf32>
    %119 = arith.mulf %117, %118 : vector<16x32xf32>
    %120 = vector.broadcast %74 : vector<1x32xf32> to vector<16x32xf32>
    %121 = arith.addf %119, %120 : vector<16x32xf32>
    %122 = arith.addf %70, %121 : vector<16x32xf32>
    %c9 = arith.constant 9 : index
    %c0_51 = arith.constant 0 : index
    %123 = vector.load %arg5[%c9, %c0_51] : memref<10x128xf32, #tpu.memory_space<vmem>>, vector<1x128xf32>
    %c0_52 = arith.constant 0 : index
    %c0_53 = arith.constant 0 : index
    %124 = vector.load %arg4[%c0_52, %c0_53] : memref<32x128xf32, #tpu.memory_space<vmem>>, vector<32x128xf32>
    %cst_54 = arith.constant dense<0.000000e+00> : vector<16x128xf32>
    %125 = tpu.matmul %122, %124, %cst_54 {dimension_numbers = #tpu.dot_dimension_numbers<[1], [0], [0], [1], [0, 0, 1, 1], [], []>} : vector<16x32xf32>, vector<32x128xf32>, vector<16x128xf32> -> vector<16x128xf32>
    %126 = vector.broadcast %123 : vector<1x128xf32> to vector<16x128xf32>
    %127 = arith.addf %125, %126 : vector<16x128xf32>
    %cst_55 = arith.constant dense<0xFF800000> : vector<16xf32>
    %128 = vector.multi_reduction <maximumf>, %127, %cst_55 [1] : vector<16x128xf32> to vector<16xf32>
    %129 = vector.shape_cast %128 : vector<16xf32> to vector<16x1xf32>
    %130 = vector.broadcast %129 : vector<16x1xf32> to vector<16x128xf32>
    %131 = arith.subf %127, %130 : vector<16x128xf32>
    %132 = math.exp %131 : vector<16x128xf32>
    %cst_56 = arith.constant dense<0.000000e+00> : vector<16xf32>
    %133 = vector.multi_reduction <add>, %132, %cst_56 [1] : vector<16x128xf32> to vector<16xf32>
    %134 = vector.shape_cast %133 : vector<16xf32> to vector<16x1xf32>
    %135 = tpu.reciprocal %134 : vector<16x1xf32> -> vector<16x1xf32>
    %136 = vector.broadcast %135 : vector<16x1xf32> to vector<16x128xf32>
    %137 = arith.mulf %132, %136 : vector<16x128xf32>
    %c0_57 = arith.constant 0 : index
    %c0_58 = arith.constant 0 : index
    %138 = vector.load %arg6[%c0_57, %c0_58] : memref<16x128xf32, #tpu.memory_space<vmem>>, vector<16x128xf32>
    tpu.vector_store %arg6[%c0_57, %c0_58], %137 {strides = array<i32>} : memref<16x128xf32, #tpu.memory_space<vmem>>, vector<16x128xf32>,
    return
  }
  func.func @transform_0(%arg0: i32) -> (i32, i32) {
    %c0_i32 = arith.constant 0 : i32
    %c0_i32_0 = arith.constant 0 : i32
    return %arg0, %c0_i32 : i32, i32
  }
  func.func @transform_1(%arg0: i32) -> (i32, i32) {
    %c0_i32 = arith.constant 0 : i32
    %c0_i32_0 = arith.constant 0 : i32
    %c0_i32_1 = arith.constant 0 : i32
    return %c0_i32, %c0_i32_0 : i32, i32
  }
  func.func @transform_2(%arg0: i32) -> (i32, i32, i32) {
    %c0_i32 = arith.constant 0 : i32
    %c0_i32_0 = arith.constant 0 : i32
    %c0_i32_1 = arith.constant 0 : i32
    %c0_i32_2 = arith.constant 0 : i32
    return %c0_i32, %c0_i32_0, %c0_i32_1 : i32, i32, i32
  }
  func.func @transform_3(%arg0: i32) -> (i32, i32) {
    %c0_i32 = arith.constant 0 : i32
    %c0_i32_0 = arith.constant 0 : i32
    %c0_i32_1 = arith.constant 0 : i32
    return %c0_i32, %c0_i32_0 : i32, i32
  }
  func.func @transform_4(%arg0: i32) -> (i32, i32) {
    %c0_i32 = arith.constant 0 : i32
    %c0_i32_0 = arith.constant 0 : i32
    %c0_i32_1 = arith.constant 0 : i32
    return %c0_i32, %c0_i32_0 : i32, i32
  }
  func.func @transform_5(%arg0: i32) -> (i32, i32) {
    %c0_i32 = arith.constant 0 : i32
    %c0_i32_0 = arith.constant 0 : i32
    return %arg0, %c0_i32 : i32, i32
  }
}

</mosaic_0001>

<llo_original>
// kernel: tpu_custom_call.1
$region0: #{tpu_custom_call.1}
  #allocation0 [shape = 'u32[]', space=smem, size = 0x4, offset = 0x4, fixed_abs, tag = 'smem constant byte address 0x4 - core index']
  #allocation1 [shape = 'u32[72,128]{1,0:T(1,128)}', space=vmem, size = 0x9000, scoped, tag = 'internal scratch']
  %s0 = inlined_call_operand.hbm [shape: f32[16,16], index: 0, kind: input, shape index: {}]
  %s1 = inlined_call_operand.hbm [shape: f32[16,32], index: 1, kind: input, shape index: {}]
  %s2 = inlined_call_operand.hbm [shape: f32[4,32,32], index: 2, kind: input, shape index: {}]
  %s3 = inlined_call_operand.hbm [shape: f32[32,128], index: 3, kind: input, shape index: {}]
  %s4 = inlined_call_operand.hbm [shape: f32[10,128], index: 4, kind: input, shape index: {}]
  %s5 = inlined_call_operand.hbm [shape: f32[16,128], index: 5, kind: output, shape index: {}]
  %s6 = sld [smem:[#allocation0]]
  $region50: #{tpu_custom_call.1} parent=0
    _
  %s8 = ssub.s32 1, %s6
  %s9 = scalar_select 0, %s8, %s6
  $region1: #{tpu_custom_call.1} parent=0
    #allocation2 [shape = 'u8[8192]{0}', space=vmem, size = 0x2000, scoped, tag = 'input window, operand 0, single buffered']
    #allocation3 [shape = 's32[1]{0}', space=sflag, size = 0x4, scoped, tag = 'scoped memory for tpu_custom_call.1']
    #allocation4 [shape = 's32[1]{0}', space=sflag, size = 0x4, scoped, tag = 'scoped memory for tpu_custom_call.1']
    #allocation5 [shape = 'u8[8192]{0}', space=vmem, size = 0x2000, scoped, tag = 'input window, operand 1, single buffered']
    #allocation6 [shape = 's32[1]{0}', space=sflag, size = 0x4, scoped, tag = 'scoped memory for tpu_custom_call.1']
    #allocation7 [shape = 'u8[65536]{0}', space=vmem, size = 0x10000, scoped, tag = 'input window, operand 2, single buffered']
    #allocation8 [shape = 'u8[16384]{0}', space=vmem, size = 0x4000, scoped, tag = 'input window, operand 3, single buffered']
    #allocation9 [shape = 's32[1]{0}', space=sflag, size = 0x4, scoped, tag = 'scoped memory for tpu_custom_call.1']
    #allocation10 [shape = 'u8[8192]{0}', space=vmem, size = 0x2000, scoped, tag = 'input window, operand 4, single buffered']
    #allocation11 [shape = 'u8[8192]{0}', space=vmem, size = 0x2000, scoped, tag = 'output window, operand 0, single buffered']
    %10 = vsyncpa [#allocation3], 0
    %11 = vsyncpa [#allocation6], 0
    %12 = vsyncpa [#allocation9], 0
    %13 = vsyncpa [#allocation4], 0
    // Predicated region
    $region2: #{tpu_custom_call.1} parent=1 // pred_check
      _
    $region3: #{tpu_custom_call.1} parent=1 // pred_check_branch
      %15 = sbr.rel (0) target = $region5
    $region4: #{tpu_custom_call.1} parent=1 // pred_region
      %17 = vsyncadd [#allocation3], 0
      %s18 = sshll.u32 %s0, 4
      %s19 = int_to_ptr.hbm [resolvable:$true] %s18
      %s20 = sshll.u32 [#allocation2], 4
      %s21 = int_to_ptr.vmem [resolvable:$true] %s20
      %26 = dma.hbm_to_vmem [thread:$0]  %s19, 256, %s21, [#allocation3], 128, 128, 8
    $region5: #{tpu_custom_call.1} parent=1 // pred_fallthru
      _
    // Predicated region
    $region6: #{tpu_custom_call.1} parent=1 // pred_check
      _
    $region7: #{tpu_custom_call.1} parent=1 // pred_check_branch
      %28 = sbr.rel (0) target = $region9
    $region8: #{tpu_custom_call.1} parent=1 // pred_region
      %30 = vsyncadd [#allocation6], 0
      %s31 = sshll.u32 %s1, 4
      %s32 = int_to_ptr.hbm [resolvable:$true] %s31
      %s33 = sshll.u32 [#allocation5], 4
      %s34 = int_to_ptr.vmem [resolvable:$true] %s33
      %39 = dma.hbm_to_vmem [thread:$0]  %s32, 256, %s34, [#allocation6], 128, 128, 8
    $region9: #{tpu_custom_call.1} parent=1 // pred_fallthru
      _
    // Predicated region
    $region10: #{tpu_custom_call.1} parent=1 // pred_check
      _
    $region11: #{tpu_custom_call.1} parent=1 // pred_check_branch
      %41 = sbr.rel (0) target = $region13
    $region12: #{tpu_custom_call.1} parent=1 // pred_region
      %43 = vsyncadd [#allocation6], 0
      %s44 = sshll.u32 %s2, 4
      %s45 = int_to_ptr.hbm [resolvable:$true] %s44
      %s46 = sshll.u32 [#allocation7], 4
      %s47 = int_to_ptr.vmem [resolvable:$true] %s46
      %52 = dma.hbm_to_vmem [thread:$0]  %s45, 2048, %s47, [#allocation6], 128, 128, 8
    $region13: #{tpu_custom_call.1} parent=1 // pred_fallthru
      _
    // Predicated region
    $region14: #{tpu_custom_call.1} parent=1 // pred_check
      _
    $region15: #{tpu_custom_call.1} parent=1 // pred_check_branch
      %54 = sbr.rel (0) target = $region17
    $region16: #{tpu_custom_call.1} parent=1 // pred_region
      %56 = vsyncadd [#allocation9], 0
      %s57 = sshll.u32 %s3, 4
      %s58 = int_to_ptr.hbm [resolvable:$true] %s57
      %s59 = sshll.u32 [#allocation8], 4
      %s60 = int_to_ptr.vmem [resolvable:$true] %s59
      %65 = dma.hbm_to_vmem [thread:$0]  %s58, 512, %s60, [#allocation9], 128, 128, 8
    $region17: #{tpu_custom_call.1} parent=1 // pred_fallthru
      _
    // Predicated region
    $region18: #{tpu_custom_call.1} parent=1 // pred_check
      _
    $region19: #{tpu_custom_call.1} parent=1 // pred_check_branch
      %67 = sbr.rel (0) target = $region21
    $region20: #{tpu_custom_call.1} parent=1 // pred_region
      %69 = vsyncadd [#allocation9], 0
      %s70 = sshll.u32 %s4, 4
      %s71 = int_to_ptr.hbm [resolvable:$true] %s70
      %s72 = sshll.u32 [#allocation10], 4
      %s73 = int_to_ptr.vmem [resolvable:$true] %s72
      %78 = dma.hbm_to_vmem [thread:$0]  %s71, 256, %s73, [#allocation9], 128, 128, 8
    $region21: #{tpu_custom_call.1} parent=1 // pred_fallthru
      _
    // Predicated region
    $region22: #{tpu_custom_call.1} parent=1 // pred_check
      _
    $region23: #{tpu_custom_call.1} parent=1 // pred_check_branch
      %80 = sbr.rel (0) target = $region25
    $region24: #{tpu_custom_call.1} parent=1 // pred_region
      %82 = dma.done [#allocation3], 256
    $region25: #{tpu_custom_call.1} parent=1 // pred_fallthru
      _
    // Predicated region
    $region26: #{tpu_custom_call.1} parent=1 // pred_check
      _
    $region27: #{tpu_custom_call.1} parent=1 // pred_check_branch
      %84 = sbr.rel (0) target = $region29
    $region28: #{tpu_custom_call.1} parent=1 // pred_region
      %86 = dma.done [#allocation6], 256
    $region29: #{tpu_custom_call.1} parent=1 // pred_fallthru
      _
    // Predicated region
    $region30: #{tpu_custom_call.1} parent=1 // pred_check
      _
    $region31: #{tpu_custom_call.1} parent=1 // pred_check_branch
      %88 = sbr.rel (0) target = $region33
    $region32: #{tpu_custom_call.1} parent=1 // pred_region
      %90 = dma.done [#allocation6], 2048
    $region33: #{tpu_custom_call.1} parent=1 // pred_fallthru
      _
    // Predicated region
    $region34: #{tpu_custom_call.1} parent=1 // pred_check
      _
    $region35: #{tpu_custom_call.1} parent=1 // pred_check_branch
      %92 = sbr.rel (0) target = $region37
    $region36: #{tpu_custom_call.1} parent=1 // pred_region
      %94 = dma.done [#allocation9], 512
    $region37: #{tpu_custom_call.1} parent=1 // pred_fallthru
      _
    // Predicated region
    $region38: #{tpu_custom_call.1} parent=1 // pred_check
      _
    $region39: #{tpu_custom_call.1} parent=1 // pred_check_branch
      %96 = sbr.rel (0) target = $region41
    $region40: #{tpu_custom_call.1} parent=1 // pred_region
      %98 = dma.done [#allocation9], 256
    $region41: #{tpu_custom_call.1} parent=1 // pred_fallthru
      _
    %v99 = vld [vmem:[#allocation2] sm:$0xff]
    %v100 = vld [vmem:[#allocation2 + $0x8] sm:$0xff]
    %v101 = vld [vmem:[#allocation5] sm:$0xff]
    %v102 = vld [vmem:[#allocation5 + $0x8] sm:$0xff]
    %v103 = vld [vmem:[#allocation10] sm:$0x1]
    %v104 = vperm.slane %v103, 0
    %vm105 = vcmask 130048
    %v107 = vsel %vm105, %v99, 0
    %v110 = vsel %vm105, %v100, 0
    %112 = vmatpush.msra.mxu0 0.0
    %113 = vmatpush.msra.mxu0 0.0
    %114 = vmatpush.msra.mxu0 0.0
    %115 = vmatpush.msra.mxu0 0.0
    %116 = vmatpush.msra.mxu0 0.0
    %117 = vmatpush.msra.mxu0 0.0
    %118 = vmatpush.msra.mxu0 0.0
    %119 = vmatpush.msra.mxu0 0.0
    %120 = vmatpush.msra.mxu0 0.0
    %121 = vmatpush.msra.mxu0 0.0
    %122 = vmatpush.msra.mxu0 0.0
    %123 = vmatpush.msra.mxu0 0.0
    %124 = vmatpush.msra.mxu0 0.0
    %125 = vmatpush.msra.mxu0 0.0
    %126 = vmatpush.msra.mxu0 %v102
    %127 = vmatpush.msra.mxu0 %v101
    %128 = vmatmul.f32.gmra.mxu0 %v107
    %v129 = vpop.f32.mrf.mxu0
    %v130 = vadd.f32 %v104, %v129
    %131 = vmatmul.f32.gmra.mxu0 %v110
    %v132 = vpop.f32.mrf.mxu0
    %v133 = vadd.f32 %v104, %v132
    %134 = vdwg.mxu0
    %v135 = vmul.f32 %v130, 0.5
    %v136 = vmul.f32 %v133, 0.5
    %v137 = vmul.f32 %v130, 0.044715
    %v138 = vmul.f32 %v133, 0.044715
    %v139 = vmul.f32 %v137, %v130
    %v140 = vmul.f32 %v138, %v133
    %v141 = vmul.f32 %v139, %v130
    %v142 = vmul.f32 %v140, %v133
    %v143 = vadd.f32 %v130, %v141
    %v144 = vadd.f32 %v133, %v142
    %v145 = vmul.f32 %v143, 0.7978846
    %v146 = vmul.f32 %v144, 0.7978846
    %v147 = vtanh.pop %v145
    %v148 = vtanh.pop %v146
    %v149 = vadd.f32 %v147, 1.0
    %v150 = vadd.f32 %v148, 1.0
    %v151 = vmul.f32 %v135, %v149
    %v152 = vmul.f32 %v136, %v150
    %v153 = vld [vmem:[#allocation10 + $0x1] sm:$0x1]
    %v154 = vld [vmem:[#allocation10 + $0x3] sm:$0x1]
    %v155 = vld [vmem:[#allocation10 + $0x5] sm:$0x1]
    %v156 = vld [vmem:[#allocation10 + $0x7] sm:$0x1]
    %v157 = vld [vmem:[#allocation7] sm:$0xff]
    %v158 = vld [vmem:[#allocation7 + $0x8] sm:$0xff]
    %v159 = vld [vmem:[#allocation7 + $0x10] sm:$0xff]
    %v160 = vld [vmem:[#allocation7 + $0x18] sm:$0xff]
    %v161 = vperm.slane %v153, 0
    %vm162 = vcmask 261120
    %v164 = vsel %vm162, %v151, 0
    %v167 = vsel %vm162, %v152, 0
    %169 = vmatpush.msra.mxu0 0.0
    %170 = vmatpush.msra.mxu0 0.0
    %171 = vmatpush.msra.mxu0 0.0
    %172 = vmatpush.msra.mxu0 0.0
    %173 = vmatpush.msra.mxu0 0.0
    %174 = vmatpush.msra.mxu0 0.0
    %175 = vmatpush.msra.mxu0 0.0
    %176 = vmatpush.msra.mxu0 0.0
    %177 = vmatpush.msra.mxu0 0.0
    %178 = vmatpush.msra.mxu0 0.0
    %179 = vmatpush.msra.mxu0 0.0
    %180 = vmatpush.msra.mxu0 0.0
    %181 = vmatpush.msra.mxu0 %v160
    %182 = vmatpush.msra.mxu0 %v159
    %183 = vmatpush.msra.mxu0 %v158
    %184 = vmatpush.msra.mxu0 %v157
    %185 = vmatmul.f32.gmra.mxu0 %v164
    %v186 = vpop.f32.mrf.mxu0
    %v187 = vadd.f32 %v161, %v186
    %188 = vmatmul.f32.gmra.mxu0 %v167
    %v189 = vpop.f32.mrf.mxu0
    %v190 = vadd.f32 %v161, %v189
    %191 = vdwg.mxu0
    %v192 = vmul.f32 %v187, 0.5
    %v193 = vmul.f32 %v190, 0.5
    %v194 = vmul.f32 %v187, 0.044715
    %v195 = vmul.f32 %v190, 0.044715
    %v196 = vmul.f32 %v194, %v187
    %v197 = vmul.f32 %v195, %v190
    %v198 = vmul.f32 %v196, %v187
    %v199 = vmul.f32 %v197, %v190
    %v200 = vadd.f32 %v187, %v198
    %v201 = vadd.f32 %v190, %v199
    %v202 = vmul.f32 %v200, 0.7978846
    %v203 = vmul.f32 %v201, 0.7978846
    %v204 = vtanh.pop %v202
    %v205 = vtanh.pop %v203
    %v206 = vadd.f32 %v204, 1.0
    %v207 = vadd.f32 %v205, 1.0
    %v208 = vmul.f32 %v192, %v206
    %v209 = vmul.f32 %v193, %v207
    %s210 = scalar_lea.vmem [#allocation7], 64
    %v211 = vld [vmem:[%s210] sm:$0xff]
    %v212 = vld [vmem:[%s210 + $0x8] sm:$0xff]
    %v213 = vld [vmem:[%s210 + $0x10] sm:$0xff]
    %v214 = vld [vmem:[%s210 + $0x18] sm:$0xff]
    %v215 = vperm.slane %v154, 0
    %v217 = vsel %vm162, %v208, 0
    %v220 = vsel %vm162, %v209, 0
    %222 = vmatpush.msra.mxu0 0.0
    %223 = vmatpush.msra.mxu0 0.0
    %224 = vmatpush.msra.mxu0 0.0
    %225 = vmatpush.msra.mxu0 0.0
    %226 = vmatpush.msra.mxu0 0.0
    %227 = vmatpush.msra.mxu0 0.0
    %228 = vmatpush.msra.mxu0 0.0
    %229 = vmatpush.msra.mxu0 0.0
    %230 = vmatpush.msra.mxu0 0.0
    %231 = vmatpush.msra.mxu0 0.0
    %232 = vmatpush.msra.mxu0 0.0
    %233 = vmatpush.msra.mxu0 0.0
    %234 = vmatpush.msra.mxu0 %v214
    %235 = vmatpush.msra.mxu0 %v213
    %236 = vmatpush.msra.mxu0 %v212
    %237 = vmatpush.msra.mxu0 %v211
    %238 = vmatmul.f32.gmra.mxu0 %v217
    %v239 = vpop.f32.mrf.mxu0
    %v240 = vadd.f32 %v215, %v239
    %241 = vmatmul.f32.gmra.mxu0 %v220
    %v242 = vpop.f32.mrf.mxu0
    %v243 = vadd.f32 %v215, %v242
    %244 = vdwg.mxu0
    %v245 = vsel %vm162, %v240, 0.0
    %246 = vadd.xlane.f32.xlu0 %v245
    %v247 = vpop.xlane.xlu0 %246
    %v248 = vsel %vm162, %v243, 0.0
    %249 = vadd.xlane.f32.xlu0 %v248
    %v250 = vpop.xlane.xlu0 %249
    %v251 = vrcp.pop 32.0
    %v252 = vmul.f32 32.0, %v251
    %v253 = vsub.f32 1.0, %v252
    %v254 = vmul.f32 %v251, %v253
    %v255 = vadd.f32 %v251, %v254
    %vm256 = vweird.f32 %v251
    %v257 = vsel %vm256, %v251, %v255
    %v258 = vmul.f32 %v247, %v257
    %v259 = vmul.f32 %v250, %v257
    %v260 = vsub.f32 %v240, %v258
    %v261 = vsub.f32 %v243, %v259
    %v262 = vmul.f32 %v260, %v260
    %v263 = vmul.f32 %v261, %v261
    %v264 = vsel %vm162, %v262, 0.0
    %265 = vadd.xlane.f32.xlu0 %v264
    %v266 = vpop.xlane.xlu0 %265
    %v267 = vsel %vm162, %v263, 0.0
    %268 = vadd.xlane.f32.xlu0 %v267
    %v269 = vpop.xlane.xlu0 %268
    %v270 = vmul.f32 %v266, %v257
    %v271 = vmul.f32 %v269, %v257
    %v272 = vadd.f32 %v270, 1e-05
    %v273 = vadd.f32 %v271, 1e-05
    %v274 = vrsqrt.pop %v272
    %v275 = vmul.f32 %v274, %v272
    %v276 = vmul.f32 %v275, %v274
    %v277 = vmul.f32 0.5, %v276
    %v278 = vsub.f32 1.5, %v277
    %v279 = vmul.f32 %v274, %v278
    %vm280 = vweird.f32 %v272
    %vm281 = vweird.f32 %v274
    %vm282 = vmor %vm280, %vm281
    %v283 = vsel %vm282, %v274, %v279
    %v284 = vrsqrt.pop %v273
    %v285 = vmul.f32 %v284, %v273
    %v286 = vmul.f32 %v285, %v284
    %v287 = vmul.f32 0.5, %v286
    %v288 = vsub.f32 1.5, %v287
    %v289 = vmul.f32 %v284, %v288
    %vm290 = vweird.f32 %v273
    %vm291 = vweird.f32 %v284
    %vm292 = vmor %vm290, %vm291
    %v293 = vsel %vm292, %v284, %v289
    %v294 = vmul.f32 %v260, %v283
    %v295 = vmul.f32 %v261, %v293
    %v296 = vperm.slane %v155, 0
    %v297 = vmul.f32 %v294, %v296
    %v298 = vmul.f32 %v295, %v296
    %v299 = vperm.slane %v156, 0
    %v300 = vadd.f32 %v297, %v299
    %v301 = vadd.f32 %v298, %v299
    %v302 = vadd.f32 %v151, %v300
    %v303 = vadd.f32 %v152, %v301
    %v304 = vld [vmem:[#allocation10 + $0x2] sm:$0x1]
    %v305 = vld [vmem:[#allocation10 + $0x4] sm:$0x1]
    %v306 = vld [vmem:[#allocation10 + $0x6] sm:$0x1]
    %v307 = vld [vmem:[#allocation10 + $0x8] sm:$0x1]
    %s308 = scalar_lea.vmem [#allocation7], 32
    %v309 = vld [vmem:[%s308] sm:$0xff]
    %v310 = vld [vmem:[%s308 + $0x8] sm:$0xff]
    %v311 = vld [vmem:[%s308 + $0x10] sm:$0xff]
    %v312 = vld [vmem:[%s308 + $0x18] sm:$0xff]
    %v313 = vperm.slane %v304, 0
    %v315 = vsel %vm162, %v302, 0
    %v318 = vsel %vm162, %v303, 0
    %320 = vmatpush.msra.mxu0 0.0
    %321 = vmatpush.msra.mxu0 0.0
    %322 = vmatpush.msra.mxu0 0.0
    %323 = vmatpush.msra.mxu0 0.0
    %324 = vmatpush.msra.mxu0 0.0
    %325 = vmatpush.msra.mxu0 0.0
    %326 = vmatpush.msra.mxu0 0.0
    %327 = vmatpush.msra.mxu0 0.0
    %328 = vmatpush.msra.mxu0 0.0
    %329 = vmatpush.msra.mxu0 0.0
    %330 = vmatpush.msra.mxu0 0.0
    %331 = vmatpush.msra.mxu0 0.0
    %332 = vmatpush.msra.mxu0 %v312
    %333 = vmatpush.msra.mxu0 %v311
    %334 = vmatpush.msra.mxu0 %v310
    %335 = vmatpush.msra.mxu0 %v309
    %336 = vmatmul.f32.gmra.mxu0 %v315
    %v337 = vpop.f32.mrf.mxu0
    %v338 = vadd.f32 %v313, %v337
    %339 = vmatmul.f32.gmra.mxu0 %v318
    %v340 = vpop.f32.mrf.mxu0
    %v341 = vadd.f32 %v313, %v340
    %342 = vdwg.mxu0
    %v343 = vmul.f32 %v338, 0.5
    %v344 = vmul.f32 %v341, 0.5
    %v345 = vmul.f32 %v338, 0.044715
    %v346 = vmul.f32 %v341, 0.044715
    %v347 = vmul.f32 %v345, %v338
    %v348 = vmul.f32 %v346, %v341
    %v349 = vmul.f32 %v347, %v338
    %v350 = vmul.f32 %v348, %v341
    %v351 = vadd.f32 %v338, %v349
    %v352 = vadd.f32 %v341, %v350
    %v353 = vmul.f32 %v351, 0.7978846
    %v354 = vmul.f32 %v352, 0.7978846
    %v355 = vtanh.pop %v353
    %v356 = vtanh.pop %v354
    %v357 = vadd.f32 %v355, 1.0
    %v358 = vadd.f32 %v356, 1.0
    %v359 = vmul.f32 %v343, %v357
    %v360 = vmul.f32 %v344, %v358
    %s361 = scalar_lea.vmem [#allocation7], 96
    %v362 = vld [vmem:[%s361] sm:$0xff]
    %v363 = vld [vmem:[%s361 + $0x8] sm:$0xff]
    %v364 = vld [vmem:[%s361 + $0x10] sm:$0xff]
    %v365 = vld [vmem:[%s361 + $0x18] sm:$0xff]
    %v366 = vperm.slane %v305, 0
    %v368 = vsel %vm162, %v359, 0
    %v371 = vsel %vm162, %v360, 0
    %373 = vmatpush.msra.mxu0 0.0
    %374 = vmatpush.msra.mxu0 0.0
    %375 = vmatpush.msra.mxu0 0.0
    %376 = vmatpush.msra.mxu0 0.0
    %377 = vmatpush.msra.mxu0 0.0
    %378 = vmatpush.msra.mxu0 0.0
    %379 = vmatpush.msra.mxu0 0.0
    %380 = vmatpush.msra.mxu0 0.0
    %381 = vmatpush.msra.mxu0 0.0
    %382 = vmatpush.msra.mxu0 0.0
    %383 = vmatpush.msra.mxu0 0.0
    %384 = vmatpush.msra.mxu0 0.0
    %385 = vmatpush.msra.mxu0 %v365
    %386 = vmatpush.msra.mxu0 %v364
    %387 = vmatpush.msra.mxu0 %v363
    %388 = vmatpush.msra.mxu0 %v362
    %389 = vmatmul.f32.gmra.mxu0 %v368
    %v390 = vpop.f32.mrf.mxu0
    %v391 = vadd.f32 %v366, %v390
    %392 = vmatmul.f32.gmra.mxu0 %v371
    %v393 = vpop.f32.mrf.mxu0
    %v394 = vadd.f32 %v366, %v393
    %395 = vdwg.mxu0
    %v396 = vsel %vm162, %v391, 0.0
    %397 = vadd.xlane.f32.xlu0 %v396
    %v398 = vpop.xlane.xlu0 %397
    %v399 = vsel %vm162, %v394, 0.0
    %400 = vadd.xlane.f32.xlu0 %v399
    %v401 = vpop.xlane.xlu0 %400
    %v402 = vmul.f32 %v398, %v257
    %v403 = vmul.f32 %v401, %v257
    %v404 = vsub.f32 %v391, %v402
    %v405 = vsub.f32 %v394, %v403
    %v406 = vmul.f32 %v404, %v404
    %v407 = vmul.f32 %v405, %v405
    %v408 = vsel %vm162, %v406, 0.0
    %409 = vadd.xlane.f32.xlu0 %v408
    %v410 = vpop.xlane.xlu0 %409
    %v411 = vsel %vm162, %v407, 0.0
    %412 = vadd.xlane.f32.xlu0 %v411
    %v413 = vpop.xlane.xlu0 %412
    %v414 = vmul.f32 %v410, %v257
    %v415 = vmul.f32 %v413, %v257
    %v416 = vadd.f32 %v414, 1e-05
    %v417 = vadd.f32 %v415, 1e-05
    %v418 = vrsqrt.pop %v416
    %v419 = vmul.f32 %v418, %v416
    %v420 = vmul.f32 %v419, %v418
    %v421 = vmul.f32 0.5, %v420
    %v422 = vsub.f32 1.5, %v421
    %v423 = vmul.f32 %v418, %v422
    %vm424 = vweird.f32 %v416
    %vm425 = vweird.f32 %v418
    %vm426 = vmor %vm424, %vm425
    %v427 = vsel %vm426, %v418, %v423
    %v428 = vrsqrt.pop %v417
    %v429 = vmul.f32 %v428, %v417
    %v430 = vmul.f32 %v429, %v428
    %v431 = vmul.f32 0.5, %v430
    %v432 = vsub.f32 1.5, %v431
    %v433 = vmul.f32 %v428, %v432
    %vm434 = vweird.f32 %v417
    %vm435 = vweird.f32 %v428
    %vm436 = vmor %vm434, %vm435
    %v437 = vsel %vm436, %v428, %v433
    %v438 = vmul.f32 %v404, %v427
    %v439 = vmul.f32 %v405, %v437
    %v440 = vperm.slane %v306, 0
    %v441 = vmul.f32 %v438, %v440
    %v442 = vmul.f32 %v439, %v440
    %v443 = vperm.slane %v307, 0
    %v444 = vadd.f32 %v441, %v443
    %v445 = vadd.f32 %v442, %v443
    %v446 = vadd.f32 %v302, %v444
    %v447 = vadd.f32 %v303, %v445
    %v448 = vld [vmem:[#allocation10 + $0x9] sm:$0x1]
    %v449 = vld [vmem:[#allocation8] sm:$0xff]
    %v450 = vld [vmem:[#allocation8 + $0x8] sm:$0xff]
    %v451 = vld [vmem:[#allocation8 + $0x10] sm:$0xff]
    %v452 = vld [vmem:[#allocation8 + $0x18] sm:$0xff]
    %v453 = vperm.slane %v448, 0
    %v455 = vsel %vm162, %v446, 0
    %v458 = vsel %vm162, %v447, 0
    %460 = vmatpush.msra.mxu0 0.0
    %461 = vmatpush.msra.mxu0 0.0
    %462 = vmatpush.msra.mxu0 0.0
    %463 = vmatpush.msra.mxu0 0.0
    %464 = vmatpush.msra.mxu0 0.0
    %465 = vmatpush.msra.mxu0 0.0
    %466 = vmatpush.msra.mxu0 0.0
    %467 = vmatpush.msra.mxu0 0.0
    %468 = vmatpush.msra.mxu0 0.0
    %469 = vmatpush.msra.mxu0 0.0
    %470 = vmatpush.msra.mxu0 0.0
    %471 = vmatpush.msra.mxu0 0.0
    %472 = vmatpush.msra.mxu0 %v452
    %473 = vmatpush.msra.mxu0 %v451
    %474 = vmatpush.msra.mxu0 %v450
    %475 = vmatpush.msra.mxu0 %v449
    %476 = vmatmul.f32.gmra.mxu0 %v455
    %v477 = vpop.f32.mrf.mxu0
    %v478 = vadd.f32 %v453, %v477
    %479 = vmatmul.f32.gmra.mxu0 %v458
    %v480 = vpop.f32.mrf.mxu0
    %v481 = vadd.f32 %v453, %v480
    %482 = vdwg.mxu0
    %483 = vmax.xlane.f32.xlu0 %v478
    %v484 = vpop.xlane.xlu0 %483
    %485 = vmax.xlane.f32.xlu0 %v481
    %v486 = vpop.xlane.xlu0 %485
    %v487 = vsub.f32 %v478, %v484
    %v488 = vsub.f32 %v481, %v486
    %v489 = vmul.f32 %v487, 1.442695
    %v490 = vpow.pop %v489
    %v491 = vmul.f32 %v488, 1.442695
    %v492 = vpow.pop %v491
    %493 = vadd.xlane.f32.xlu0 %v490
    %v494 = vpop.xlane.xlu0 %493
    %495 = vadd.xlane.f32.xlu0 %v492
    %v496 = vpop.xlane.xlu0 %495
    %v497 = vrcp.pop %v494
    %v498 = vmul.f32 %v494, %v497
    %v499 = vsub.f32 1.0, %v498
    %v500 = vmul.f32 %v497, %v499
    %v501 = vadd.f32 %v497, %v500
    %vm502 = vweird.f32 %v494
    %vm503 = vweird.f32 %v497
    %vm504 = vmor %vm502, %vm503
    %v505 = vsel %vm504, %v497, %v501
    %v506 = vand.u32 2147483647, %v494
    %vm507 = vcmp.eq.f32.partialorder %v506, 8.507059e+37
    %v508 = vand.u32 %v494, 2147483648
    %v509 = vor.u32 1.1754944e-38, %v508
    %v510 = vsel %vm507, %v509, %v505
    %v511 = vrcp.pop %v496
    %v512 = vmul.f32 %v496, %v511
    %v513 = vsub.f32 1.0, %v512
    %v514 = vmul.f32 %v511, %v513
    %v515 = vadd.f32 %v511, %v514
    %vm516 = vweird.f32 %v496
    %vm517 = vweird.f32 %v511
    %vm518 = vmor %vm516, %vm517
    %v519 = vsel %vm518, %v511, %v515
    %v520 = vand.u32 2147483647, %v496
    %vm521 = vcmp.eq.f32.partialorder %v520, 8.507059e+37
    %v522 = vand.u32 %v496, 2147483648
    %v523 = vor.u32 1.1754944e-38, %v522
    %v524 = vsel %vm521, %v523, %v519
    %v525 = vmul.f32 %v490, %v510
    %v526 = vmul.f32 %v492, %v524
    %527 = vst [vmem:[#allocation11] sm:$0xff] %v525
    %528 = vst [vmem:[#allocation11 + $0x8] sm:$0xff] %v526
    // Predicated region
    $region42: #{tpu_custom_call.1} parent=1 // pred_check
      _
    $region43: #{tpu_custom_call.1} parent=1 // pred_check_branch
      %530 = sbr.rel (0) target = $region45
    $region44: #{tpu_custom_call.1} parent=1 // pred_region
      %532 = vsyncadd [#allocation4], 0
      %s533 = sshll.u32 [#allocation11], 4
      %s534 = int_to_ptr.vmem [resolvable:$true] %s533
      %s535 = sshll.u32 %s5, 4
      %s536 = int_to_ptr.hbm [resolvable:$true] %s535
      %541 = dma.vmem_to_hbm [thread:$0]  %s534, 256, %s536, [#allocation4], 128, 128, 8
    $region45: #{tpu_custom_call.1} parent=1 // pred_fallthru
      _
    // Predicated region
    $region46: #{tpu_custom_call.1} parent=1 // pred_check
      _
    $region47: #{tpu_custom_call.1} parent=1 // pred_check_branch
      %543 = sbr.rel (0) target = $region49
    $region48: #{tpu_custom_call.1} parent=1 // pred_region
      %545 = dma.done [#allocation4], 256
    $region49: #{tpu_custom_call.1} parent=1 // pred_fallthru
      _
    %546 = vsyncpa [#allocation3], 1
    %547 = vsyncpa [#allocation6], 1
    %548 = vsyncpa [#allocation9], 1
    %549 = vsyncpa [#allocation4], 1

</llo_original>
